<compile_context>
chip_gen: v7x
topology: tpu7x:2x2x1
jax: 0.10.0
libtpu: 0.0.40
codegen_flags: <defaults>
</compile_context>

<pallas_src>
import jax
import jax.numpy as jnp
from jax.experimental import pallas as pl
from jax.experimental.pallas import tpu as pltpu

D_USER = 512
D_QUERY = 513               # X_data[:, 512:1025]
D_TOTAL = D_USER + D_QUERY  # 1025
HIDDEN = 32
H2 = 2 * HIDDEN             # 64: [user | query] embedding columns


def _round_up(x, m):
    return ((x + m - 1) // m) * m


def lr_net_kernel(x_ref, w_ref, b_ref, out_ref):
    # Single fused projection: (TB, 1025) @ (1025, 64) -> (TB, 64).
    # Inputs may be bf16 or f32; accumulation is always f32, and everything after
    # the MXU (bias, mul, sum, sigmoid) stays in f32.
    y = jnp.dot(x_ref[...], w_ref[...], preferred_element_type=jnp.float32)
    y = y + b_ref[...].astype(jnp.float32)
    user_feat = y[:, :HIDDEN]    # columns 0..31  == x_user  @ w_user  + b_user
    query_feat = y[:, HIDDEN:]   # columns 32..63 == x_query @ w_query + b_query
    # inner_product = sum(user * query, dim=1) -> (TB, 1)
    inner = jnp.sum(user_feat * query_feat, axis=1, keepdims=True)
    out_ref[...] = jax.nn.sigmoid(inner)


def build_combined_params(w_user, b_user, w_query, b_query):
    """Fold the two Linear layers into one block-diagonal (1025, 64) weight + (1, 64) bias.

    Off-diagonal blocks are exactly zero so user columns never see query rows and
    vice versa (correctness requirement for the fused contraction).
    """
    w_comb = jnp.zeros((D_TOTAL, H2), jnp.float32)
    w_comb = w_comb.at[:D_USER, :HIDDEN].set(w_user)
    w_comb = w_comb.at[D_USER:, HIDDEN:].set(w_query)
    b_comb = jnp.concatenate([b_user, b_query], axis=1)  # (1, 64)
    return w_comb, b_comb


def lr_net_forward(x_data, w_comb, b_comb, *, batch_tile=2048):
    """x_data: (B, 1025) f32 or bf16. w_comb: (1025, 64) same dtype family.
    b_comb: (1, 64) f32.  Returns (B,) f32 sigmoid of the inner product."""
    B = x_data.shape[0]

    # Tile the batch.  If the tile is the whole batch, block == full dim (always
    # legal).  Otherwise keep TB a multiple of 8 so the (8,128) sublane rule holds;
    # the last block may be partial (handled by Pallas writeback masking).
    TB = min(batch_tile, B)
    if TB < B:
        TB = max(8, (TB // 8) * 8)
    grid = (pl.cdiv(B, TB),)

    x_bytes = jnp.dtype(x_data.dtype).itemsize
    w_bytes = jnp.dtype(w_comb.dtype).itemsize

    # Explicit VMEM budget using VMEM-PADDED shapes:
    #   x block:  (TB, 1025) -> lanes pad to 1152 (9 * 128)
    #   weights:  (1025, 64) -> (1032, 128)
    #   bias:     (1, 64)    -> (8, 128)
    #   output:   (TB, 1)    -> (TB, 128)
    x_block_pad = TB * _round_up(D_TOTAL, 128) * x_bytes
    out_block_pad = TB * 128 * 4
    w_pad = _round_up(D_TOTAL, 8) * _round_up(H2, 128) * w_bytes
    b_pad = 8 * 128 * 4
    vmem_budget = (
        2 * x_block_pad        # input block, double-buffered
        + 2 * out_block_pad    # output block, double-buffered
        + 2 * w_pad            # combined weight (counted double-buffered to be safe)
        + 2 * b_pad            # combined bias
        + (2 << 20)            # headroom
    )

    # Advisory cost estimate (fused matmul FLOPs; half are against structural zeros).
    cost = pl.CostEstimate(
        flops=2 * B * D_TOTAL * H2,
        transcendentals=B,  # one sigmoid per row
        bytes_accessed=B * D_TOTAL * x_bytes + D_TOTAL * H2 * w_bytes + H2 * 4 + B * 4,
    )

    out = pl.pallas_call(
        lr_net_kernel,
        out_shape=jax.ShapeDtypeStruct((B, 1), jnp.float32),
        grid=grid,
        in_specs=[
            pl.BlockSpec((TB, D_TOTAL), lambda i: (i, 0)),     # x tile, streamed
            pl.BlockSpec((D_TOTAL, H2), lambda i: (0, 0)),     # weights, VMEM-resident
            pl.BlockSpec((1, H2), lambda i: (0, 0)),           # bias, VMEM-resident
        ],
        out_specs=pl.BlockSpec((TB, 1), lambda i: (i, 0)),
        compiler_params=pltpu.CompilerParams(
            dimension_semantics=("parallel",),                 # megacore-shard the batch
            vmem_limit_bytes=int(vmem_budget),
        ),
        cost_estimate=cost,
    )(x_data, w_comb, b_comb)
    return out[:, 0]


def make_params():
    """Deterministic synthetic parameters for the two sub-models."""
    k = jax.random.PRNGKey(42)
    k1, k2, k3, k4 = jax.random.split(k, 4)
    w_user = jax.random.normal(k1, (D_USER, HIDDEN), jnp.float32) * 0.02
    b_user = jax.random.normal(k2, (1, HIDDEN), jnp.float32) * 0.01
    w_query = jax.random.normal(k3, (D_QUERY, HIDDEN), jnp.float32) * 0.02
    b_query = jax.random.normal(k4, (1, HIDDEN), jnp.float32) * 0.01
    return w_user, b_user, w_query, b_query


if __name__ == "__main__":
    # B=13: not a multiple of 8 and not divisible by the 8-row test tile, so the
    # partial-last-block writeback path is exercised.
    B = 13
    key = jax.random.PRNGKey(0)
    x_f32 = jax.random.normal(key, (B, D_TOTAL), jnp.float32)

    w_user, b_user, w_query, b_query = make_params()
    w_comb, b_comb = build_combined_params(w_user, b_user, w_query, b_query)

    # Pure-JAX reference with the original (split) formulation.
    uf = x_f32[:, :D_USER] @ w_user + b_user
    qf = x_f32[:, D_USER:D_TOTAL] @ w_query + b_query
    ref = jax.nn.sigmoid(jnp.sum(uf * qf, axis=1))

    # --- f32 path (tight tolerance), small tile to exercise multi-step grid + partial block.
    res_f32 = lr_net_forward(x_f32, w_comb, b_comb, batch_tile=8)
    res_f32 = jax.block_until_ready(res_f32)
    assert res_f32.shape == (B,)
    assert jnp.allclose(res_f32, ref, atol=1e-5, rtol=1e-5)

    # --- bf16 streaming path (inputs/weights in HBM as bf16, f32 accumulate + f32 epilogue).
    x_bf16 = x_f32.astype(jnp.bfloat16)
    w_bf16 = w_comb.astype(jnp.bfloat16)
    res_bf16 = lr_net_forward(x_bf16, w_bf16, b_comb, batch_tile=8)
    res_bf16 = jax.block_until_ready(res_bf16)
    assert res_bf16.shape == (B,)
    assert jnp.allclose(res_bf16, ref, atol=3e-2, rtol=3e-2)

    # --- default (large-tile) configuration, single grid step for this small B.
    res_default = lr_net_forward(x_f32, w_comb, b_comb)
    res_default = jax.block_until_ready(res_default)
    assert jnp.allclose(res_default, ref, atol=1e-5, rtol=1e-5)

    print("KERNEL_OK")
</pallas_src>

<mosaic_0001>
module attributes {stable_mosaic.version = 11 : i64} {
  func.func @lr_net_kernel(%arg0: i32, %arg1: memref<8x1025xf32, #tpu.memory_space<vmem>>, %arg2: memref<1025x64xf32, #tpu.memory_space<vmem>>, %arg3: memref<1x64xf32, #tpu.memory_space<vmem>>, %arg4: memref<8x1xf32, #tpu.memory_space<vmem>>) attributes {dimension_semantics = [#tpu.dimension_semantics<parallel>], iteration_bounds = array<i64: 2>, scalar_prefetch = 0 : i64, scratch_operands = 0 : i64, tpu.core_type = #tpu.core_type<tc>, window_params = [{transform_indices = @transform_0, window_bounds = array<i64: 8, 1025>}, {pipeline_mode = #tpu.pipeline_mode<synchronous>, transform_indices = @transform_1, window_bounds = array<i64: 1025, 64>}, {pipeline_mode = #tpu.pipeline_mode<synchronous>, transform_indices = @transform_2, window_bounds = array<i64: 1, 64>}, {transform_indices = @transform_3, window_bounds = array<i64: 8, 1>}]} {
    %c0 = arith.constant 0 : index
    %c0_0 = arith.constant 0 : index
    %0 = vector.load %arg1[%c0, %c0_0] : memref<8x1025xf32, #tpu.memory_space<vmem>>, vector<8x1025xf32>
    %c0_1 = arith.constant 0 : index
    %c0_2 = arith.constant 0 : index
    %1 = vector.load %arg2[%c0_1, %c0_2] : memref<1025x64xf32, #tpu.memory_space<vmem>>, vector<1025x64xf32>
    %cst = arith.constant dense<0.000000e+00> : vector<8x64xf32>
    %2 = tpu.matmul %0, %1, %cst {dimension_numbers = #tpu.dot_dimension_numbers<[1], [0], [0], [1], [0, 0, 1, 1], [], []>} : vector<8x1025xf32>, vector<1025x64xf32>, vector<8x64xf32> -> vector<8x64xf32>
    %c0_3 = arith.constant 0 : index
    %c0_4 = arith.constant 0 : index
    %3 = vector.load %arg3[%c0_3, %c0_4] : memref<1x64xf32, #tpu.memory_space<vmem>>, vector<1x64xf32>
    %4 = vector.broadcast %3 : vector<1x64xf32> to vector<8x64xf32>
    %5 = arith.addf %2, %4 : vector<8x64xf32>
    %6 = vector.extract_strided_slice %5 {offsets = [0, 0], sizes = [8, 32], strides = [1, 1]} : vector<8x64xf32> to vector<8x32xf32>
    %7 = vector.extract_strided_slice %5 {offsets = [0, 32], sizes = [8, 32], strides = [1, 1]} : vector<8x64xf32> to vector<8x32xf32>
    %8 = arith.mulf %6, %7 : vector<8x32xf32>
    %cst_5 = arith.constant dense<0.000000e+00> : vector<8xf32>
    %9 = vector.multi_reduction <add>, %8, %cst_5 [1] : vector<8x32xf32> to vector<8xf32>
    %10 = vector.shape_cast %9 : vector<8xf32> to vector<8x1xf32>
    %11 = arith.negf %10 : vector<8x1xf32>
    %12 = math.exp %11 : vector<8x1xf32>
    %cst_6 = arith.constant 1.000000e+00 : f32
    %13 = vector.broadcast %cst_6 : f32 to vector<8x1xf32>
    %14 = arith.addf %13, %12 : vector<8x1xf32>
    %15 = arith.divf %13, %14 : vector<8x1xf32>
    %c0_7 = arith.constant 0 : index
    %c0_8 = arith.constant 0 : index
    %16 = vector.load %arg4[%c0_7, %c0_8] : memref<8x1xf32, #tpu.memory_space<vmem>>, vector<8x1xf32>
    tpu.vector_store %arg4[%c0_7, %c0_8], %15 {strides = array<i32>} : memref<8x1xf32, #tpu.memory_space<vmem>>, vector<8x1xf32>,
    return
  }
  func.func @transform_0(%arg0: i32) -> (i32, i32) {
    %c0_i32 = arith.constant 0 : i32
    %c0_i32_0 = arith.constant 0 : i32
    return %arg0, %c0_i32 : i32, i32
  }
  func.func @transform_1(%arg0: i32) -> (i32, i32) {
    %c0_i32 = arith.constant 0 : i32
    %c0_i32_0 = arith.constant 0 : i32
    %c0_i32_1 = arith.constant 0 : i32
    return %c0_i32, %c0_i32_0 : i32, i32
  }
  func.func @transform_2(%arg0: i32) -> (i32, i32) {
    %c0_i32 = arith.constant 0 : i32
    %c0_i32_0 = arith.constant 0 : i32
    %c0_i32_1 = arith.constant 0 : i32
    return %c0_i32, %c0_i32_0 : i32, i32
  }
  func.func @transform_3(%arg0: i32) -> (i32, i32) {
    %c0_i32 = arith.constant 0 : i32
    %c0_i32_0 = arith.constant 0 : i32
    return %arg0, %c0_i32 : i32, i32
  }
}

</mosaic_0001>

<llo_original>
// kernel: tpu_custom_call.1
$region0: #{tpu_custom_call.1}
  #allocation0 [shape = 'u32[]', space=smem, size = 0x4, offset = 0x4, fixed_abs, tag = 'smem constant byte address 0x4 - core index']
  #allocation1 [shape = 'u32[144,128]{1,0:T(1,128)}', space=vmem, size = 0x12000, scoped, tag = 'internal scratch']
  %s0 = inlined_call_operand.vmem [shape: f32[13,1025], index: 0, kind: input, shape index: {}]
  %s1 = inlined_call_operand.vmem [shape: f32[1025,64], index: 1, kind: input, shape index: {}]
  %s2 = inlined_call_operand.vmem [shape: f32[1,64], index: 2, kind: input, shape index: {}]
  %s3 = inlined_call_operand.vmem [shape: f32[13,1], index: 3, kind: output, shape index: {}]
  %s4 = sld [smem:[#allocation0]]
  $region45: #{tpu_custom_call.1} parent=0
    _
  %s6 = ssub.s32 1, %s4
  %s7 = scalar_select 0, %s6, %s4
  loop: start=0, step=1, limit=4
  $region2: #{tpu_custom_call.1} parent=0 // loop_pre_header
    _
  $region3: #{tpu_custom_call.1} parent=0 // loop_header
    %s9 = sphi 0, %s13
    %p10 = scmp.ge.s32.totalorder %s9, 4
    %s19 = sphi 0, %s21
    %s22 = sphi 0, %s19
    %s23 = sphi 0, %s22
    %s39 = sphi 0, %s23
    %s43 = sphi 0, %s43
    %s45 = sphi 0, %s43
    %s46 = sphi 0, %s45
    %s60 = sphi 0, %s46
    %s64 = sphi 0, %s64
    %s66 = sphi 0, %s64
    %s67 = sphi 0, %s66
    %s81 = sphi 0, %s67
    %s87 = sphi 0, %s89
    %s90 = sphi 0, %s87
    %s91 = sphi 0, %s90
    %s107 = sphi 0, %s91
  $region4: #{tpu_custom_call.1} parent=0 // loop_header_branch
    %12 = sbr.rel (%p10) target = $region8
  $region5: #{tpu_custom_call.1} parent=0 // loop_body
    %s14 = ssub.s32 %s9, 1
    %s15 = ssub.s32 %s9, 2
    %s16 = sadd.s32 %s9, 1
    %s17 = ssub.s32 %s9, %s16
    %p18 = scmp.eq.s32.totalorder %s17, 0
    %s20 = sadd.s32 %s19, 1
    %s21 = scalar_select %p18, %s19, %s20
    %p24 = pneg %p18
    %p25 = scmp.eq.s32.totalorder %s9, 1
    %p26 = por %p24, %p25
    %p27 = scmp.ne.s32.totalorder %s19, %s22
    %p28 = scmp.eq.s32.totalorder %s9, 0
    %p29 = por %p27, %p28
    %p30 = scmp.ne.s32.totalorder %s19, %s22
    %p31 = scmp.eq.s32.totalorder %s14, 1
    %p32 = por %p30, %p31
    %p33 = scmp.ne.s32.totalorder %s22, %s23
    %p34 = scmp.eq.s32.totalorder %s14, 0
    %p35 = por %p33, %p34
    %p36 = scmp.ne.s32.totalorder %s22, %s23
    %p37 = scmp.eq.s32.totalorder %s15, 1
    %p38 = por %p36, %p37
    %p40 = scmp.ne.s32.totalorder %s23, %s39
    %p41 = scmp.eq.s32.totalorder %s15, 0
    %p42 = por %p40, %p41
    %s44 = sadd.s32 %s43, 1
    %p47 = scmp.eq.s32.totalorder %s9, 1
    %p48 = scmp.ne.s32.totalorder %s43, %s45
    %p49 = scmp.eq.s32.totalorder %s9, 0
    %p50 = por %p48, %p49
    %p51 = scmp.ne.s32.totalorder %s43, %s45
    %p52 = scmp.eq.s32.totalorder %s14, 1
    %p53 = por %p51, %p52
    %p54 = scmp.ne.s32.totalorder %s45, %s46
    %p55 = scmp.eq.s32.totalorder %s14, 0
    %p56 = por %p54, %p55
    %p57 = scmp.ne.s32.totalorder %s45, %s46
    %p58 = scmp.eq.s32.totalorder %s15, 1
    %p59 = por %p57, %p58
    %p61 = scmp.ne.s32.totalorder %s46, %s60
    %p62 = scmp.eq.s32.totalorder %s15, 0
    %p63 = por %p61, %p62
    %s65 = sadd.s32 %s64, 1
    %p68 = scmp.eq.s32.totalorder %s9, 1
    %p69 = scmp.ne.s32.totalorder %s64, %s66
    %p70 = scmp.eq.s32.totalorder %s9, 0
    %p71 = por %p69, %p70
    %p72 = scmp.ne.s32.totalorder %s64, %s66
    %p73 = scmp.eq.s32.totalorder %s14, 1
    %p74 = por %p72, %p73
    %p75 = scmp.ne.s32.totalorder %s66, %s67
    %p76 = scmp.eq.s32.totalorder %s14, 0
    %p77 = por %p75, %p76
    %p78 = scmp.ne.s32.totalorder %s66, %s67
    %p79 = scmp.eq.s32.totalorder %s15, 1
    %p80 = por %p78, %p79
    %p82 = scmp.ne.s32.totalorder %s67, %s81
    %p83 = scmp.eq.s32.totalorder %s15, 0
    %p84 = por %p82, %p83
    %s85 = ssub.s32 %s9, %s16
    %p86 = scmp.eq.s32.totalorder %s85, 0
    %s88 = sadd.s32 %s87, 1
    %s89 = scalar_select %p86, %s87, %s88
    %p92 = pneg %p86
    %p93 = scmp.eq.s32.totalorder %s9, 1
    %p94 = por %p92, %p93
    %p95 = scmp.ne.s32.totalorder %s87, %s90
    %p96 = scmp.eq.s32.totalorder %s9, 0
    %p97 = por %p95, %p96
    %p98 = scmp.ne.s32.totalorder %s87, %s90
    %p99 = scmp.eq.s32.totalorder %s14, 1
    %p100 = por %p98, %p99
    %p101 = scmp.ne.s32.totalorder %s90, %s91
    %p102 = scmp.eq.s32.totalorder %s14, 0
    %p103 = por %p101, %p102
    %p104 = scmp.ne.s32.totalorder %s90, %s91
    %p105 = scmp.eq.s32.totalorder %s15, 1
    %p106 = por %p104, %p105
    %p108 = scmp.ne.s32.totalorder %s91, %s107
    %p109 = scmp.eq.s32.totalorder %s15, 0
    %p110 = por %p108, %p109
    %p111 = scmp.le.s32.totalorder 1, %s9
    %p112 = scmp.lt.s32.totalorder %s9, 3
    %p113 = pnand %p111, %p112
    %p114 = pneg %p113
    // Predicated region
    $region9: #{tpu_custom_call.1} parent=5 // pred_check
      _
    $region10: #{tpu_custom_call.1} parent=5 // pred_check_branch
      %116 = sbr.rel (%p113) target = $region12
    $region11: #{tpu_custom_call.1} parent=5 // pred_region
      %s117 = ssub.s32 %s9, 1
      // Predicated region
      $region13: #{tpu_custom_call.1} parent=11 // pred_check
        %p118 = pneg %p56
      $region14: #{tpu_custom_call.1} parent=11 // pred_check_branch
        %120 = sbr.rel (%p118) target = $region16
      $region15: #{tpu_custom_call.1} parent=11 // pred_region
        _
      $region16: #{tpu_custom_call.1} parent=11 // pred_fallthru
        _
      // Predicated region
      $region17: #{tpu_custom_call.1} parent=11 // pred_check
        %p121 = pneg %p77
      $region18: #{tpu_custom_call.1} parent=11 // pred_check_branch
        %123 = sbr.rel (%p121) target = $region20
      $region19: #{tpu_custom_call.1} parent=11 // pred_region
        _
      $region20: #{tpu_custom_call.1} parent=11 // pred_fallthru
        _
    $region12: #{tpu_custom_call.1} parent=5 // pred_fallthru
      _
    %p124 = scmp.lt.s32.totalorder %s9, 2
    // Predicated region
    $region21: #{tpu_custom_call.1} parent=5 // pred_check
      %p125 = pneg %p124
    $region22: #{tpu_custom_call.1} parent=5 // pred_check_branch
      %127 = sbr.rel (%p125) target = $region24
    $region23: #{tpu_custom_call.1} parent=5 // pred_region
      // Predicated region
      $region25: #{tpu_custom_call.1} parent=23 // pred_check
        %p128 = pneg %p29
      $region26: #{tpu_custom_call.1} parent=23 // pred_check_branch
        %130 = sbr.rel (%p128) target = $region28
      $region27: #{tpu_custom_call.1} parent=23 // pred_region
        %p131 = scmp.lt.s32.totalorder %s9, 1
        %s132 = scalar_select %p131, %s9, 1
        %s133 = smul.addr %s132, 9
        %s134 = smul.addr %s133, 8
        %s135 = scalar_lea.vmem %s0, %s134
      $region28: #{tpu_custom_call.1} parent=23 // pred_fallthru
        _
    $region24: #{tpu_custom_call.1} parent=5 // pred_fallthru
      _
    %p136 = scmp.le.s32.totalorder 1, %s9
    %p137 = scmp.lt.s32.totalorder %s9, 3
    %p138 = pnand %p136, %p137
    %p139 = pneg %p138
    // Predicated region
    $region29: #{tpu_custom_call.1} parent=5 // pred_check
      _
    $region30: #{tpu_custom_call.1} parent=5 // pred_check_branch
      %141 = sbr.rel (%p138) target = $region32
    $region31: #{tpu_custom_call.1} parent=5 // pred_region
      %s142 = ssub.s32 %s9, 1
      %p143 = scmp.lt.s32.totalorder %s14, 1
      %s144 = scalar_select %p143, %s14, 1
      %s145 = smul.addr %s144, 9
      %s146 = smul.addr %s145, 8
      %s147 = scalar_lea.vmem %s0, %s146
      %p148 = pneg %p35
      %p149 = pneg %p32
      %p150 = pneg %p56
      %p151 = pneg %p53
      %p152 = pneg %p77
      %p153 = pneg %p74
      %p154 = pneg %p103
      %p155 = pneg %p100
      %p156 = scmp.lt.s32.totalorder %s14, 1
      %s157 = scalar_select %p156, %s14, 1
      %s158 = smul.addr %s157, 8
      %s159 = scalar_lea.vmem %s3, %s158
      %p160 = scmp.lt.s32.totalorder %s14, 1
      %s161 = scalar_select %p160, %s14, 1
      %s162 = smul.addr %s161, 9
      %s163 = smul.addr %s162, 8
      %s164 = scalar_lea.vmem %s0, %s163
      %p165 = scmp.lt.s32.totalorder %s14, 1
      %s166 = scalar_select %p165, %s14, 1
      %s167 = smul.addr %s166, 8
      %s168 = scalar_lea.vmem %s3, %s167
      %v169 = vld [vmem:[%s164] sm:$0xff]
      %v170 = vld [vmem:[%s164 + $0x8] sm:$0xff]
      %v171 = vld [vmem:[%s164 + $0x10] sm:$0xff]
      %v172 = vld [vmem:[%s164 + $0x18] sm:$0xff]
      %v173 = vld [vmem:[%s164 + $0x20] sm:$0xff]
      %v174 = vld [vmem:[%s164 + $0x28] sm:$0xff]
      %v175 = vld [vmem:[%s164 + $0x30] sm:$0xff]
      %v176 = vld [vmem:[%s164 + $0x38] sm:$0xff]
      %v177 = vld [vmem:[%s164 + $0x40] sm:$0xff]
      %v178 = vld [vmem:[%s1] sm:$0xff]
      %v179 = vld [vmem:[%s1 + $0x8] sm:$0xff]
      %v180 = vld [vmem:[%s1 + $0x10] sm:$0xff]
      %v181 = vld [vmem:[%s1 + $0x18] sm:$0xff]
      %v182 = vld [vmem:[%s1 + $0x20] sm:$0xff]
      %v183 = vld [vmem:[%s1 + $0x28] sm:$0xff]
      %v184 = vld [vmem:[%s1 + $0x30] sm:$0xff]
      %v185 = vld [vmem:[%s1 + $0x38] sm:$0xff]
      %v186 = vld [vmem:[%s1 + $0x40] sm:$0xff]
      %v187 = vld [vmem:[%s1 + $0x48] sm:$0xff]
      %v188 = vld [vmem:[%s1 + $0x50] sm:$0xff]
      %v189 = vld [vmem:[%s1 + $0x58] sm:$0xff]
      %v190 = vld [vmem:[%s1 + $0x60] sm:$0xff]
      %v191 = vld [vmem:[%s1 + $0x68] sm:$0xff]
      %v192 = vld [vmem:[%s1 + $0x70] sm:$0xff]
      %v193 = vld [vmem:[%s1 + $0x78] sm:$0xff]
      %v194 = vld [vmem:[%s1 + $0x80] sm:$0xff]
      %v195 = vld [vmem:[%s1 + $0x88] sm:$0xff]
      %v196 = vld [vmem:[%s1 + $0x90] sm:$0xff]
      %v197 = vld [vmem:[%s1 + $0x98] sm:$0xff]
      %v198 = vld [vmem:[%s1 + $0xa0] sm:$0xff]
      %v199 = vld [vmem:[%s1 + $0xa8] sm:$0xff]
      %v200 = vld [vmem:[%s1 + $0xb0] sm:$0xff]
      %v201 = vld [vmem:[%s1 + $0xb8] sm:$0xff]
      %v202 = vld [vmem:[%s1 + $0xc0] sm:$0xff]
      %v203 = vld [vmem:[%s1 + $0xc8] sm:$0xff]
      %v204 = vld [vmem:[%s1 + $0xd0] sm:$0xff]
      %v205 = vld [vmem:[%s1 + $0xd8] sm:$0xff]
      %v206 = vld [vmem:[%s1 + $0xe0] sm:$0xff]
      %v207 = vld [vmem:[%s1 + $0xe8] sm:$0xff]
      %v208 = vld [vmem:[%s1 + $0xf0] sm:$0xff]
      %v209 = vld [vmem:[%s1 + $0xf8] sm:$0xff]
      %v210 = vld [vmem:[%s1 + $0x100] sm:$0xff]
      %v211 = vld [vmem:[%s1 + $0x108] sm:$0xff]
      %v212 = vld [vmem:[%s1 + $0x110] sm:$0xff]
      %v213 = vld [vmem:[%s1 + $0x118] sm:$0xff]
      %v214 = vld [vmem:[%s1 + $0x120] sm:$0xff]
      %v215 = vld [vmem:[%s1 + $0x128] sm:$0xff]
      %v216 = vld [vmem:[%s1 + $0x130] sm:$0xff]
      %v217 = vld [vmem:[%s1 + $0x138] sm:$0xff]
      %v218 = vld [vmem:[%s1 + $0x140] sm:$0xff]
      %v219 = vld [vmem:[%s1 + $0x148] sm:$0xff]
      %v220 = vld [vmem:[%s1 + $0x150] sm:$0xff]
      %v221 = vld [vmem:[%s1 + $0x158] sm:$0xff]
      %v222 = vld [vmem:[%s1 + $0x160] sm:$0xff]
      %v223 = vld [vmem:[%s1 + $0x168] sm:$0xff]
      %v224 = vld [vmem:[%s1 + $0x170] sm:$0xff]
      %v225 = vld [vmem:[%s1 + $0x178] sm:$0xff]
      %v226 = vld [vmem:[%s1 + $0x180] sm:$0xff]
      %v227 = vld [vmem:[%s1 + $0x188] sm:$0xff]
      %v228 = vld [vmem:[%s1 + $0x190] sm:$0xff]
      %v229 = vld [vmem:[%s1 + $0x198] sm:$0xff]
      %v230 = vld [vmem:[%s1 + $0x1a0] sm:$0xff]
      %v231 = vld [vmem:[%s1 + $0x1a8] sm:$0xff]
      %v232 = vld [vmem:[%s1 + $0x1b0] sm:$0xff]
      %v233 = vld [vmem:[%s1 + $0x1b8] sm:$0xff]
      %v234 = vld [vmem:[%s1 + $0x1c0] sm:$0xff]
      %v235 = vld [vmem:[%s1 + $0x1c8] sm:$0xff]
      %v236 = vld [vmem:[%s1 + $0x1d0] sm:$0xff]
      %v237 = vld [vmem:[%s1 + $0x1d8] sm:$0xff]
      %v238 = vld [vmem:[%s1 + $0x1e0] sm:$0xff]
      %v239 = vld [vmem:[%s1 + $0x1e8] sm:$0xff]
      %v240 = vld [vmem:[%s1 + $0x1f0] sm:$0xff]
      %v241 = vld [vmem:[%s1 + $0x1f8] sm:$0xff]
      %v242 = vld [vmem:[%s1 + $0x200] sm:$0xff]
      %v243 = vld [vmem:[%s1 + $0x208] sm:$0xff]
      %v244 = vld [vmem:[%s1 + $0x210] sm:$0xff]
      %v245 = vld [vmem:[%s1 + $0x218] sm:$0xff]
      %v246 = vld [vmem:[%s1 + $0x220] sm:$0xff]
      %v247 = vld [vmem:[%s1 + $0x228] sm:$0xff]
      %v248 = vld [vmem:[%s1 + $0x230] sm:$0xff]
      %v249 = vld [vmem:[%s1 + $0x238] sm:$0xff]
      %v250 = vld [vmem:[%s1 + $0x240] sm:$0xff]
      %v251 = vld [vmem:[%s1 + $0x248] sm:$0xff]
      %v252 = vld [vmem:[%s1 + $0x250] sm:$0xff]
      %v253 = vld [vmem:[%s1 + $0x258] sm:$0xff]
      %v254 = vld [vmem:[%s1 + $0x260] sm:$0xff]
      %v255 = vld [vmem:[%s1 + $0x268] sm:$0xff]
      %v256 = vld [vmem:[%s1 + $0x270] sm:$0xff]
      %v257 = vld [vmem:[%s1 + $0x278] sm:$0xff]
      %v258 = vld [vmem:[%s1 + $0x280] sm:$0xff]
      %v259 = vld [vmem:[%s1 + $0x288] sm:$0xff]
      %v260 = vld [vmem:[%s1 + $0x290] sm:$0xff]
      %v261 = vld [vmem:[%s1 + $0x298] sm:$0xff]
      %v262 = vld [vmem:[%s1 + $0x2a0] sm:$0xff]
      %v263 = vld [vmem:[%s1 + $0x2a8] sm:$0xff]
      %v264 = vld [vmem:[%s1 + $0x2b0] sm:$0xff]
      %v265 = vld [vmem:[%s1 + $0x2b8] sm:$0xff]
      %v266 = vld [vmem:[%s1 + $0x2c0] sm:$0xff]
      %v267 = vld [vmem:[%s1 + $0x2c8] sm:$0xff]
      %v268 = vld [vmem:[%s1 + $0x2d0] sm:$0xff]
      %v269 = vld [vmem:[%s1 + $0x2d8] sm:$0xff]
      %v270 = vld [vmem:[%s1 + $0x2e0] sm:$0xff]
      %v271 = vld [vmem:[%s1 + $0x2e8] sm:$0xff]
      %v272 = vld [vmem:[%s1 + $0x2f0] sm:$0xff]
      %v273 = vld [vmem:[%s1 + $0x2f8] sm:$0xff]
      %v274 = vld [vmem:[%s1 + $0x300] sm:$0xff]
      %v275 = vld [vmem:[%s1 + $0x308] sm:$0xff]
      %v276 = vld [vmem:[%s1 + $0x310] sm:$0xff]
      %v277 = vld [vmem:[%s1 + $0x318] sm:$0xff]
      %v278 = vld [vmem:[%s1 + $0x320] sm:$0xff]
      %v279 = vld [vmem:[%s1 + $0x328] sm:$0xff]
      %v280 = vld [vmem:[%s1 + $0x330] sm:$0xff]
      %v281 = vld [vmem:[%s1 + $0x338] sm:$0xff]
      %v282 = vld [vmem:[%s1 + $0x340] sm:$0xff]
      %v283 = vld [vmem:[%s1 + $0x348] sm:$0xff]
      %v284 = vld [vmem:[%s1 + $0x350] sm:$0xff]
      %v285 = vld [vmem:[%s1 + $0x358] sm:$0xff]
      %v286 = vld [vmem:[%s1 + $0x360] sm:$0xff]
      %v287 = vld [vmem:[%s1 + $0x368] sm:$0xff]
      %v288 = vld [vmem:[%s1 + $0x370] sm:$0xff]
      %v289 = vld [vmem:[%s1 + $0x378] sm:$0xff]
      %v290 = vld [vmem:[%s1 + $0x380] sm:$0xff]
      %v291 = vld [vmem:[%s1 + $0x388] sm:$0xff]
      %v292 = vld [vmem:[%s1 + $0x390] sm:$0xff]
      %v293 = vld [vmem:[%s1 + $0x398] sm:$0xff]
      %v294 = vld [vmem:[%s1 + $0x3a0] sm:$0xff]
      %v295 = vld [vmem:[%s1 + $0x3a8] sm:$0xff]
      %v296 = vld [vmem:[%s1 + $0x3b0] sm:$0xff]
      %v297 = vld [vmem:[%s1 + $0x3b8] sm:$0xff]
      %v298 = vld [vmem:[%s1 + $0x3c0] sm:$0xff]
      %v299 = vld [vmem:[%s1 + $0x3c8] sm:$0xff]
      %v300 = vld [vmem:[%s1 + $0x3d0] sm:$0xff]
      %v301 = vld [vmem:[%s1 + $0x3d8] sm:$0xff]
      %v302 = vld [vmem:[%s1 + $0x3e0] sm:$0xff]
      %v303 = vld [vmem:[%s1 + $0x3e8] sm:$0xff]
      %v304 = vld [vmem:[%s1 + $0x3f0] sm:$0xff]
      %v305 = vld [vmem:[%s1 + $0x3f8] sm:$0xff]
      %v306 = vld [vmem:[%s1 + $0x400] sm:$0x1]
      %v307 = vld [vmem:[%s2] sm:$0x1]
      %v309 = vlaneseq
      %v310 = vshrl.u32 %v309, 7
      %v311 = vsub.s32 0, %v310
      %v312 = vrot.slane %v307, %v311
      %vm314 = vcmask 7168
      %v316 = vsel %vm314, %v177, 0
      %vm318 = vcmask 1040384
      %v320 = vsel %vm318, %v306, 0
      %322 = vmatprep.subr.mxu0 0.0
      %323 = vmatpush1.msra.mxu0 %v178
      %324 = vmatprep.subr.mxu0 0.0
      %325 = vmatpush1.msra.mxu0 %v179
      %326 = vmatprep.subr.mxu0 0.0
      %327 = vmatpush1.msra.mxu0 %v180
      %328 = vmatprep.subr.mxu0 0.0
      %329 = vmatpush1.msra.mxu0 %v181
      %330 = vmatprep.subr.mxu0 0.0
      %331 = vmatpush1.msra.mxu0 %v182
      %332 = vmatprep.subr.mxu0 0.0
      %333 = vmatpush1.msra.mxu0 %v183
      %334 = vmatprep.subr.mxu0 0.0
      %335 = vmatpush1.msra.mxu0 %v184
      %336 = vmatprep.subr.mxu0 0.0
      %337 = vmatpush1.msra.mxu0 %v185
      %338 = vmatprep.subr.mxu0 0.0
      %339 = vmatpush1.msra.mxu0 %v186
      %340 = vmatprep.subr.mxu0 0.0
      %341 = vmatpush1.msra.mxu0 %v187
      %342 = vmatprep.subr.mxu0 0.0
      %343 = vmatpush1.msra.mxu0 %v188
      %344 = vmatprep.subr.mxu0 0.0
      %345 = vmatpush1.msra.mxu0 %v189
      %346 = vmatprep.subr.mxu0 0.0
      %347 = vmatpush1.msra.mxu0 %v190
      %348 = vmatprep.subr.mxu0 0.0
      %349 = vmatpush1.msra.mxu0 %v191
      %350 = vmatprep.subr.mxu0 0.0
      %351 = vmatpush1.msra.mxu0 %v192
      %352 = vmatprep.subr.mxu0 0.0
      %353 = vmatpush1.msra.mxu0 %v193
      %354 = vmatprep.subr.mxu0 0.0
      %355 = vmatpush1.msra.mxu0 %v194
      %356 = vmatprep.subr.mxu0 0.0
      %357 = vmatpush1.msra.mxu0 %v195
      %358 = vmatprep.subr.mxu0 0.0
      %359 = vmatpush1.msra.mxu0 %v196
      %360 = vmatprep.subr.mxu0 0.0
      %361 = vmatpush1.msra.mxu0 %v197
      %362 = vmatprep.subr.mxu0 0.0
      %363 = vmatpush1.msra.mxu0 %v198
      %364 = vmatprep.subr.mxu0 0.0
      %365 = vmatpush1.msra.mxu0 %v199
      %366 = vmatprep.subr.mxu0 0.0
      %367 = vmatpush1.msra.mxu0 %v200
      %368 = vmatprep.subr.mxu0 0.0
      %369 = vmatpush1.msra.mxu0 %v201
      %370 = vmatprep.subr.mxu0 0.0
      %371 = vmatpush1.msra.mxu0 %v202
      %372 = vmatprep.subr.mxu0 0.0
      %373 = vmatpush1.msra.mxu0 %v203
      %374 = vmatprep.subr.mxu0 0.0
      %375 = vmatpush1.msra.mxu0 %v204
      %376 = vmatprep.subr.mxu0 0.0
      %377 = vmatpush1.msra.mxu0 %v205
      %378 = vmatprep.subr.mxu0 0.0
      %379 = vmatpush1.msra.mxu0 %v206
      %380 = vmatprep.subr.mxu0 0.0
      %381 = vmatpush1.msra.mxu0 %v207
      %382 = vmatprep.subr.mxu0 0.0
      %383 = vmatpush1.msra.mxu0 %v208
      %384 = vmatprep.subr.mxu0 0.0
      %385 = vmatpush1.msra.mxu0 %v209
      %386 = vmatprep.mubr.f32.mxu0 %v170
      %387 = vmatmul.mubr.f32.gmra.mrb[0].mxu0 %v169
      %v388 = vpop.f32.mrb[0].mxu0
      %v389 = vadd.f32 %v312, %v388
      %v390 = vpop.f32.mrb[0].mxu0
      %391 = vdwg.mxu0
      %392 = vmatprep.subr.mxu0 0.0
      %393 = vmatpush1.msra.mxu0 %v210
      %394 = vmatprep.subr.mxu0 0.0
      %395 = vmatpush1.msra.mxu0 %v211
      %396 = vmatprep.subr.mxu0 0.0
      %397 = vmatpush1.msra.mxu0 %v212
      %398 = vmatprep.subr.mxu0 0.0
      %399 = vmatpush1.msra.mxu0 %v213
      %400 = vmatprep.subr.mxu0 0.0
      %401 = vmatpush1.msra.mxu0 %v214
      %402 = vmatprep.subr.mxu0 0.0
      %403 = vmatpush1.msra.mxu0 %v215
      %404 = vmatprep.subr.mxu0 0.0
      %405 = vmatpush1.msra.mxu0 %v216
      %406 = vmatprep.subr.mxu0 0.0
      %407 = vmatpush1.msra.mxu0 %v217
      %408 = vmatprep.subr.mxu0 0.0
      %409 = vmatpush1.msra.mxu0 %v218
      %410 = vmatprep.subr.mxu0 0.0
      %411 = vmatpush1.msra.mxu0 %v219
      %412 = vmatprep.subr.mxu0 0.0
      %413 = vmatpush1.msra.mxu0 %v220
      %414 = vmatprep.subr.mxu0 0.0
      %415 = vmatpush1.msra.mxu0 %v221
      %416 = vmatprep.subr.mxu0 0.0
      %417 = vmatpush1.msra.mxu0 %v222
      %418 = vmatprep.subr.mxu0 0.0
      %419 = vmatpush1.msra.mxu0 %v223
      %420 = vmatprep.subr.mxu0 0.0
      %421 = vmatpush1.msra.mxu0 %v224
      %422 = vmatprep.subr.mxu0 0.0
      %423 = vmatpush1.msra.mxu0 %v225
      %424 = vmatprep.subr.mxu0 0.0
      %425 = vmatpush1.msra.mxu0 %v226
      %426 = vmatprep.subr.mxu0 0.0
      %427 = vmatpush1.msra.mxu0 %v227
      %428 = vmatprep.subr.mxu0 0.0
      %429 = vmatpush1.msra.mxu0 %v228
      %430 = vmatprep.subr.mxu0 0.0
      %431 = vmatpush1.msra.mxu0 %v229
      %432 = vmatprep.subr.mxu0 0.0
      %433 = vmatpush1.msra.mxu0 %v230
      %434 = vmatprep.subr.mxu0 0.0
      %435 = vmatpush1.msra.mxu0 %v231
      %436 = vmatprep.subr.mxu0 0.0
      %437 = vmatpush1.msra.mxu0 %v232
      %438 = vmatprep.subr.mxu0 0.0
      %439 = vmatpush1.msra.mxu0 %v233
      %440 = vmatprep.subr.mxu0 0.0
      %441 = vmatpush1.msra.mxu0 %v234
      %442 = vmatprep.subr.mxu0 0.0
      %443 = vmatpush1.msra.mxu0 %v235
      %444 = vmatprep.subr.mxu0 0.0
      %445 = vmatpush1.msra.mxu0 %v236
      %446 = vmatprep.subr.mxu0 0.0
      %447 = vmatpush1.msra.mxu0 %v237
      %448 = vmatprep.subr.mxu0 0.0
      %449 = vmatpush1.msra.mxu0 %v238
      %450 = vmatprep.subr.mxu0 0.0
      %451 = vmatpush1.msra.mxu0 %v239
      %452 = vmatprep.subr.mxu0 0.0
      %453 = vmatpush1.msra.mxu0 %v240
      %454 = vmatprep.subr.mxu0 0.0
      %455 = vmatpush1.msra.mxu0 %v241
      %456 = vmatprep.mubr.f32.mxu0 %v172
      %457 = vmatmul.mubr.f32.gmra.mrb[0].mxu0 %v171
      %v458 = vpop.f32.mrb[0].mxu0
      %v459 = vadd.f32 %v389, %v458
      %v460 = vpop.f32.mrb[0].mxu0
      %461 = vdwg.mxu0
      %462 = vmatprep.subr.mxu0 0.0
      %463 = vmatpush1.msra.mxu0 %v242
      %464 = vmatprep.subr.mxu0 0.0
      %465 = vmatpush1.msra.mxu0 %v243
      %466 = vmatprep.subr.mxu0 0.0
      %467 = vmatpush1.msra.mxu0 %v244
      %468 = vmatprep.subr.mxu0 0.0
      %469 = vmatpush1.msra.mxu0 %v245
      %470 = vmatprep.subr.mxu0 0.0
      %471 = vmatpush1.msra.mxu0 %v246
      %472 = vmatprep.subr.mxu0 0.0
      %473 = vmatpush1.msra.mxu0 %v247
      %474 = vmatprep.subr.mxu0 0.0
      %475 = vmatpush1.msra.mxu0 %v248
      %476 = vmatprep.subr.mxu0 0.0
      %477 = vmatpush1.msra.mxu0 %v249
      %478 = vmatprep.subr.mxu0 0.0
      %479 = vmatpush1.msra.mxu0 %v250
      %480 = vmatprep.subr.mxu0 0.0
      %481 = vmatpush1.msra.mxu0 %v251
      %482 = vmatprep.subr.mxu0 0.0
      %483 = vmatpush1.msra.mxu0 %v252
      %484 = vmatprep.subr.mxu0 0.0
      %485 = vmatpush1.msra.mxu0 %v253
      %486 = vmatprep.subr.mxu0 0.0
      %487 = vmatpush1.msra.mxu0 %v254
      %488 = vmatprep.subr.mxu0 0.0
      %489 = vmatpush1.msra.mxu0 %v255
      %490 = vmatprep.subr.mxu0 0.0
      %491 = vmatpush1.msra.mxu0 %v256
      %492 = vmatprep.subr.mxu0 0.0
      %493 = vmatpush1.msra.mxu0 %v257
      %494 = vmatprep.subr.mxu0 0.0
      %495 = vmatpush1.msra.mxu0 %v258
      %496 = vmatprep.subr.mxu0 0.0
      %497 = vmatpush1.msra.mxu0 %v259
      %498 = vmatprep.subr.mxu0 0.0
      %499 = vmatpush1.msra.mxu0 %v260
      %500 = vmatprep.subr.mxu0 0.0
      %501 = vmatpush1.msra.mxu0 %v261
      %502 = vmatprep.subr.mxu0 0.0
      %503 = vmatpush1.msra.mxu0 %v262
      %504 = vmatprep.subr.mxu0 0.0
      %505 = vmatpush1.msra.mxu0 %v263
      %506 = vmatprep.subr.mxu0 0.0
      %507 = vmatpush1.msra.mxu0 %v264
      %508 = vmatprep.subr.mxu0 0.0
      %509 = vmatpush1.msra.mxu0 %v265
      %510 = vmatprep.subr.mxu0 0.0
      %511 = vmatpush1.msra.mxu0 %v266
      %512 = vmatprep.subr.mxu0 0.0
      %513 = vmatpush1.msra.mxu0 %v267
      %514 = vmatprep.subr.mxu0 0.0
      %515 = vmatpush1.msra.mxu0 %v268
      %516 = vmatprep.subr.mxu0 0.0
      %517 = vmatpush1.msra.mxu0 %v269
      %518 = vmatprep.subr.mxu0 0.0
      %519 = vmatpush1.msra.mxu0 %v270
      %520 = vmatprep.subr.mxu0 0.0
      %521 = vmatpush1.msra.mxu0 %v271
      %522 = vmatprep.subr.mxu0 0.0
      %523 = vmatpush1.msra.mxu0 %v272
      %524 = vmatprep.subr.mxu0 0.0
      %525 = vmatpush1.msra.mxu0 %v273
      %526 = vmatprep.mubr.f32.mxu0 %v174
      %527 = vmatmul.mubr.f32.gmra.mrb[0].mxu0 %v173
      %v528 = vpop.f32.mrb[0].mxu0
      %v529 = vadd.f32 %v459, %v528
      %v530 = vpop.f32.mrb[0].mxu0
      %531 = vdwg.mxu0
      %532 = vmatprep.subr.mxu0 0.0
      %533 = vmatpush1.msra.mxu0 %v274
      %534 = vmatprep.subr.mxu0 0.0
      %535 = vmatpush1.msra.mxu0 %v275
      %536 = vmatprep.subr.mxu0 0.0
      %537 = vmatpush1.msra.mxu0 %v276
      %538 = vmatprep.subr.mxu0 0.0
      %539 = vmatpush1.msra.mxu0 %v277
      %540 = vmatprep.subr.mxu0 0.0
      %541 = vmatpush1.msra.mxu0 %v278
      %542 = vmatprep.subr.mxu0 0.0
      %543 = vmatpush1.msra.mxu0 %v279
      %544 = vmatprep.subr.mxu0 0.0
      %545 = vmatpush1.msra.mxu0 %v280
      %546 = vmatprep.subr.mxu0 0.0
      %547 = vmatpush1.msra.mxu0 %v281
      %548 = vmatprep.subr.mxu0 0.0
      %549 = vmatpush1.msra.mxu0 %v282
      %550 = vmatprep.subr.mxu0 0.0
      %551 = vmatpush1.msra.mxu0 %v283
      %552 = vmatprep.subr.mxu0 0.0
      %553 = vmatpush1.msra.mxu0 %v284
      %554 = vmatprep.subr.mxu0 0.0
      %555 = vmatpush1.msra.mxu0 %v285
      %556 = vmatprep.subr.mxu0 0.0
      %557 = vmatpush1.msra.mxu0 %v286
      %558 = vmatprep.subr.mxu0 0.0
      %559 = vmatpush1.msra.mxu0 %v287
      %560 = vmatprep.subr.mxu0 0.0
      %561 = vmatpush1.msra.mxu0 %v288
      %562 = vmatprep.subr.mxu0 0.0
      %563 = vmatpush1.msra.mxu0 %v289
      %564 = vmatprep.subr.mxu0 0.0
      %565 = vmatpush1.msra.mxu0 %v290
      %566 = vmatprep.subr.mxu0 0.0
      %567 = vmatpush1.msra.mxu0 %v291
      %568 = vmatprep.subr.mxu0 0.0
      %569 = vmatpush1.msra.mxu0 %v292
      %570 = vmatprep.subr.mxu0 0.0
      %571 = vmatpush1.msra.mxu0 %v293
      %572 = vmatprep.subr.mxu0 0.0
      %573 = vmatpush1.msra.mxu0 %v294
      %574 = vmatprep.subr.mxu0 0.0
      %575 = vmatpush1.msra.mxu0 %v295
      %576 = vmatprep.subr.mxu0 0.0
      %577 = vmatpush1.msra.mxu0 %v296
      %578 = vmatprep.subr.mxu0 0.0
      %579 = vmatpush1.msra.mxu0 %v297
      %580 = vmatprep.subr.mxu0 0.0
      %581 = vmatpush1.msra.mxu0 %v298
      %582 = vmatprep.subr.mxu0 0.0
      %583 = vmatpush1.msra.mxu0 %v299
      %584 = vmatprep.subr.mxu0 0.0
      %585 = vmatpush1.msra.mxu0 %v300
      %586 = vmatprep.subr.mxu0 0.0
      %587 = vmatpush1.msra.mxu0 %v301
      %588 = vmatprep.subr.mxu0 0.0
      %589 = vmatpush1.msra.mxu0 %v302
      %590 = vmatprep.subr.mxu0 0.0
      %591 = vmatpush1.msra.mxu0 %v303
      %592 = vmatprep.subr.mxu0 0.0
      %593 = vmatpush1.msra.mxu0 %v304
      %594 = vmatprep.subr.mxu0 0.0
      %595 = vmatpush1.msra.mxu0 %v305
      %596 = vmatprep.mubr.f32.mxu0 %v176
      %597 = vmatmul.mubr.f32.gmra.mrb[0].mxu0 %v175
      %v598 = vpop.f32.mrb[0].mxu0
      %v599 = vadd.f32 %v529, %v598
      %v600 = vpop.f32.mrb[0].mxu0
      %601 = vdwg.mxu0
      %602 = vmatprep.subr.mxu0 0.0
      %603 = vmatpush1.msra.mxu0 %v320
      %604 = vmatprep.subr.mxu0 0.0
      %605 = vmatpush1.msra.mxu0 0.0
      %606 = vmatprep.subr.mxu0 0.0
      %607 = vmatpush1.msra.mxu0 0.0
      %608 = vmatprep.subr.mxu0 0.0
      %609 = vmatpush1.msra.mxu0 0.0
      %610 = vmatprep.subr.mxu0 0.0
      %611 = vmatpush1.msra.mxu0 0.0
      %612 = vmatprep.subr.mxu0 0.0
      %613 = vmatpush1.msra.mxu0 0.0
      %614 = vmatprep.subr.mxu0 0.0
      %615 = vmatpush1.msra.mxu0 0.0
      %616 = vmatprep.subr.mxu0 0.0
      %617 = vmatpush1.msra.mxu0 0.0
      %618 = vmatprep.subr.mxu0 0.0
      %619 = vmatpush1.msra.mxu0 0.0
      %620 = vmatprep.subr.mxu0 0.0
      %621 = vmatpush1.msra.mxu0 0.0
      %622 = vmatprep.subr.mxu0 0.0
      %623 = vmatpush1.msra.mxu0 0.0
      %624 = vmatprep.subr.mxu0 0.0
      %625 = vmatpush1.msra.mxu0 0.0
      %626 = vmatprep.subr.mxu0 0.0
      %627 = vmatpush1.msra.mxu0 0.0
      %628 = vmatprep.subr.mxu0 0.0
      %629 = vmatpush1.msra.mxu0 0.0
      %630 = vmatprep.subr.mxu0 0.0
      %631 = vmatpush1.msra.mxu0 0.0
      %632 = vmatprep.subr.mxu0 0.0
      %633 = vmatpush1.msra.mxu0 0.0
      %634 = vmatprep.subr.mxu0 0.0
      %635 = vmatpush1.msra.mxu0 0.0
      %636 = vmatprep.subr.mxu0 0.0
      %637 = vmatpush1.msra.mxu0 0.0
      %638 = vmatprep.subr.mxu0 0.0
      %639 = vmatpush1.msra.mxu0 0.0
      %640 = vmatprep.subr.mxu0 0.0
      %641 = vmatpush1.msra.mxu0 0.0
      %642 = vmatprep.subr.mxu0 0.0
      %643 = vmatpush1.msra.mxu0 0.0
      %644 = vmatprep.subr.mxu0 0.0
      %645 = vmatpush1.msra.mxu0 0.0
      %646 = vmatprep.subr.mxu0 0.0
      %647 = vmatpush1.msra.mxu0 0.0
      %648 = vmatprep.subr.mxu0 0.0
      %649 = vmatpush1.msra.mxu0 0.0
      %650 = vmatprep.subr.mxu0 0.0
      %651 = vmatpush1.msra.mxu0 0.0
      %652 = vmatprep.subr.mxu0 0.0
      %653 = vmatpush1.msra.mxu0 0.0
      %654 = vmatprep.subr.mxu0 0.0
      %655 = vmatpush1.msra.mxu0 0.0
      %656 = vmatprep.subr.mxu0 0.0
      %657 = vmatpush1.msra.mxu0 0.0
      %658 = vmatprep.subr.mxu0 0.0
      %659 = vmatpush1.msra.mxu0 0.0
      %660 = vmatprep.subr.mxu0 0.0
      %661 = vmatpush1.msra.mxu0 0.0
      %662 = vmatprep.subr.mxu0 0.0
      %663 = vmatpush1.msra.mxu0 0.0
      %664 = vmatprep.subr.mxu0 0.0
      %665 = vmatpush1.msra.mxu0 0.0
      %666 = vmatprep.mubr.f32.mxu0 0.0
      %667 = vmatmul.mubr.f32.gmra.mrb[0].mxu0 %v316
      %v668 = vpop.f32.mrb[0].mxu0
      %v669 = vadd.f32 %v599, %v668
      %v670 = vpop.f32.mrb[0].mxu0
      %671 = vdwg.mxu0
      %673 = vrot.lane.b32.xlu0 %v669, 96
      %v674 = vpop.permute.xlu0 %673
      %v676 = vmul.f32 %v669, %v674
      %vm677 = vcmask 261120
      %v678 = vsel %vm677, %v676, 0.0
      %679 = vadd.xlane.f32.xlu0 %v678
      %v680 = vpop.xlane.xlu0 %679
      %v681 = vxor.u32 %v680, 2147483648
      %v682 = vmul.f32 %v681, 1.442695
      %v683 = vpow.pop %v682
      %v684 = vadd.f32 %v683, 1.0
      %v685 = vrcp.pop %v684
      %v686 = vmul.f32 1.0, %v685
      %687 = vst.msk [vmem:[%s168] sm:$0xff] %vm314, %v686
      %p688 = scmp.lt.s32.totalorder %s14, 1
      %s689 = scalar_select %p688, %s14, 1
      %s690 = smul.addr %s689, 8
      %s691 = scalar_lea.vmem %s3, %s690
      // Predicated region
      $region33: #{tpu_custom_call.1} parent=31 // pred_check
        %p692 = pneg %p100
      $region34: #{tpu_custom_call.1} parent=31 // pred_check_branch
        %694 = sbr.rel (%p692) target = $region36
      $region35: #{tpu_custom_call.1} parent=31 // pred_region
        _
      $region36: #{tpu_custom_call.1} parent=31 // pred_fallthru
        _
    $region32: #{tpu_custom_call.1} parent=5 // pred_fallthru
      _
    %p695 = scmp.le.s32.totalorder 2, %s9
    // Predicated region
    $region37: #{tpu_custom_call.1} parent=5 // pred_check
      %p696 = pneg %p695
    $region38: #{tpu_custom_call.1} parent=5 // pred_check_branch
      %698 = sbr.rel (%p696) target = $region40
    $region39: #{tpu_custom_call.1} parent=5 // pred_region
      %s699 = ssub.s32 %s9, 2
      // Predicated region
      $region41: #{tpu_custom_call.1} parent=39 // pred_check
        %p700 = pneg %p106
      $region42: #{tpu_custom_call.1} parent=39 // pred_check_branch
        %702 = sbr.rel (%p700) target = $region44
      $region43: #{tpu_custom_call.1} parent=39 // pred_region
        %p703 = scmp.lt.s32.totalorder %s15, 1
        %s704 = scalar_select %p703, %s15, 1
        %s705 = smul.addr %s704, 8
        %s706 = scalar_lea.vmem %s3, %s705
      $region44: #{tpu_custom_call.1} parent=39 // pred_fallthru
        _
    $region40: #{tpu_custom_call.1} parent=5 // pred_fallthru
      _
  $region6: #{tpu_custom_call.1} parent=0 // loop_footer
    %s13 = sadd.s32 1, %s9
  $region7: #{tpu_custom_call.1} parent=0 // loop_footer_branch
    %8 = sbr.rel target = $region3
  $region8: #{tpu_custom_call.1} parent=0 // loop_exit
    _

</llo_original>
